<compile_context>
chip_gen: v5e
topology: v5e:2x2
jax: 0.10.0
libtpu: 0.0.40
codegen_flags: <defaults>
</compile_context>

<pallas_src>
import functools

import jax
import jax.numpy as jnp
from jax.experimental import pallas as pl
from jax.experimental.pallas import tpu as pltpu

HIDDEN = 256
LANE = 128
SUBLANE = 16  # bf16 sublane packing -> batch tile multiple of 16


def _round_up(x, m):
    return (x + m - 1) // m * m


def _pick_batch_tile(batch):
    """Batch tile: multiple of 16 rows, capped at 4096, >=2 grid steps when big."""
    b_pad = _round_up(max(batch, 1), SUBLANE)
    tb = min(4096, b_pad)
    # v7x has 2 TensorCores: for large batches make sure the "parallel" grid
    # axis has at least 2 steps so both cores get work (harmless on v5e/v6e).
    if tb == b_pad and b_pad >= 1024:
        tb = _round_up(b_pad // 2, SUBLANE)
    return tb


def _actor_kernel(x_ref, w1_ref, b1_ref, w2_ref, b2_ref, w3_ref, b3_ref,
                  o_ref, h1_ref, h2_ref, *, max_action):
    # Layer 1: bf16 MXU matmul (f32 accum) + f32 bias/ReLU -> bf16 scratch.
    h1 = jnp.dot(x_ref[...], w1_ref[...], preferred_element_type=jnp.float32)
    h1_ref[...] = jnp.maximum(h1 + b1_ref[...], 0.0).astype(h1_ref.dtype)

    # Layer 2: same recipe -> bf16 scratch.
    h2 = jnp.dot(h1_ref[...], w2_ref[...], preferred_element_type=jnp.float32)
    h2_ref[...] = jnp.maximum(h2 + b2_ref[...], 0.0).astype(h2_ref.dtype)

    # Layer 3: Linear + bias + Tanh (f32), scaled by static max_action.
    h3 = jnp.dot(h2_ref[...], w3_ref[...], preferred_element_type=jnp.float32)
    o_ref[...] = (jnp.tanh(h3 + b3_ref[...]) * max_action).astype(o_ref.dtype)


def prepare_actor_params(params):
    """One-time (per parameter update) cast/pad of the Actor parameters.

    Keeps the per-forward hot path down to a single bf16 cast of the state.
    """
    w1, b1, w2, b2, w3, b3 = params
    A = w3.shape[1]
    cdt = jnp.bfloat16

    # Lane-dense padded output path only pays off for wide action spaces.
    A_out = _round_up(A, LANE) if A >= LANE else A

    w1p = w1.astype(cdt)                                   # (S, 256)
    w2p = w2.astype(cdt)                                   # (256, 256)
    b1p = b1.reshape(1, -1).astype(jnp.float32)            # (1, 256)
    b2p = b2.reshape(1, -1).astype(jnp.float32)            # (1, 256)
    if A_out != A:
        w3p = jnp.zeros((w3.shape[0], A_out), cdt).at[:, :A].set(w3.astype(cdt))
        b3p = jnp.zeros((1, A_out), jnp.float32).at[:, :A].set(
            b3.reshape(1, -1).astype(jnp.float32))
    else:
        w3p = w3.astype(cdt)                               # (256, A)
        b3p = b3.reshape(1, -1).astype(jnp.float32)        # (1, A)

    return {"w1": w1p, "b1": b1p, "w2": w2p, "b2": b2p,
            "w3": w3p, "b3": b3p, "action_dim": A}


def actor_forward(state, prepared, max_action):
    """state: [B, state_dim] f32 -> [B, action_dim] f32."""
    w1p, b1p = prepared["w1"], prepared["b1"]
    w2p, b2p = prepared["w2"], prepared["b2"]
    w3p, b3p = prepared["w3"], prepared["b3"]
    A = prepared["action_dim"]
    A_out = w3p.shape[1]

    B, S = state.shape
    assert w1p.shape[0] == S

    TB = _pick_batch_tile(B)
    B_pad = _round_up(B, TB)

    cdt = jnp.bfloat16  # MXU-native compute dtype; accumulation stays f32.

    # Hot path: just a cast (+ row pad only if the batch isn't tile-aligned).
    x = state.astype(cdt)
    if B_pad != B:
        x = jnp.pad(x, ((0, B_pad - B), (0, 0)))

    grid = (B_pad // TB,)

    flops = 2 * B_pad * (S * HIDDEN + HIDDEN * HIDDEN + HIDDEN * A_out)
    bytes_accessed = (x.size * 2
                      + (w1p.size + w2p.size + w3p.size) * 2
                      + (b1p.size + b2p.size + b3p.size) * 4
                      + B_pad * A_out * 4)
    cost = pl.CostEstimate(flops=flops,
                           transcendentals=B_pad * A_out,
                           bytes_accessed=bytes_accessed)

    kernel = functools.partial(_actor_kernel, max_action=float(max_action))
    out = pl.pallas_call(
        kernel,
        out_shape=jax.ShapeDtypeStruct((B_pad, A_out), jnp.float32),
        grid=grid,
        in_specs=[
            pl.BlockSpec((TB, S), lambda i: (i, 0)),          # state tile
            pl.BlockSpec((S, HIDDEN), lambda i: (0, 0)),      # w1 (VMEM-resident)
            pl.BlockSpec((1, HIDDEN), lambda i: (0, 0)),      # b1
            pl.BlockSpec((HIDDEN, HIDDEN), lambda i: (0, 0)), # w2
            pl.BlockSpec((1, HIDDEN), lambda i: (0, 0)),      # b2
            pl.BlockSpec((HIDDEN, A_out), lambda i: (0, 0)),  # w3
            pl.BlockSpec((1, A_out), lambda i: (0, 0)),       # b3
        ],
        out_specs=pl.BlockSpec((TB, A_out), lambda i: (i, 0)),
        scratch_shapes=[pltpu.VMEM((TB, HIDDEN), jnp.bfloat16),
                        pltpu.VMEM((TB, HIDDEN), jnp.bfloat16)],
        compiler_params=pltpu.CompilerParams(
            dimension_semantics=("parallel",),
            # ~5 MB footprint at TB=4096; 32 MiB is safe on every generation
            # (never exceeds v7x's 64 MiB physical VMEM per TensorCore).
            vmem_limit_bytes=32 << 20),
        cost_estimate=cost,
    )(x, w1p, b1p, w2p, b2p, w3p, b3p)

    if B_pad != B or A_out != A:
        out = out[:B, :A]
    return out


def init_actor_params(key, state_dim, action_dim, hidden=HIDDEN):
    """Deterministic PyTorch-style uniform(-1/sqrt(fan_in), 1/sqrt(fan_in)) init."""
    ks = jax.random.split(key, 6)

    def lin(kw, kb, fan_in, fan_out):
        bound = 1.0 / jnp.sqrt(jnp.float32(fan_in))
        w = jax.random.uniform(kw, (fan_in, fan_out), jnp.float32, -bound, bound)
        b = jax.random.uniform(kb, (1, fan_out), jnp.float32, -bound, bound)
        return w, b

    w1, b1 = lin(ks[0], ks[1], state_dim, hidden)
    w2, b2 = lin(ks[2], ks[3], hidden, hidden)
    w3, b3 = lin(ks[4], ks[5], hidden, action_dim)
    return (w1, b1, w2, b2, w3, b3)


def actor_reference_f32(state, params, max_action):
    """Pure-JAX f32 reference (matches the PyTorch module up to bf16 error)."""
    w1, b1, w2, b2, w3, b3 = params
    h = jnp.maximum(state @ w1 + b1, 0.0)
    h = jnp.maximum(h @ w2 + b2, 0.0)
    return jnp.tanh(h @ w3 + b3) * max_action


def actor_reference_bf16(state, params, max_action):
    """Pure-JAX reference with the same bf16-compute / f32-accum recipe."""
    w1, b1, w2, b2, w3, b3 = params
    cdt = jnp.bfloat16
    h = jnp.dot(state.astype(cdt), w1.astype(cdt),
                preferred_element_type=jnp.float32) + b1
    h = jnp.maximum(h, 0.0)
    h = jnp.dot(h.astype(cdt), w2.astype(cdt),
                preferred_element_type=jnp.float32) + b2
    h = jnp.maximum(h, 0.0)
    h = jnp.dot(h.astype(cdt), w3.astype(cdt),
                preferred_element_type=jnp.float32) + b3
    return jnp.tanh(h) * max_action


if __name__ == "__main__":
    key = jax.random.PRNGKey(0)
    k_param, k_state = jax.random.split(key)

    batch = 2
    state_dim = 8
    action_dim = 4
    max_action = 2.0

    params = init_actor_params(k_param, state_dim, action_dim)
    state = jax.random.normal(k_state, (batch, state_dim), jnp.float32)

    # Parameter prep happens once, outside the per-step hot path.
    prepared = prepare_actor_params(params)

    out = actor_forward(state, prepared, max_action)
    out = jax.block_until_ready(out)
    assert out.shape == (batch, action_dim)

    # Tight check vs a matching bf16-compute reference, loose check vs f32.
    ref_bf16 = actor_reference_bf16(state, params, max_action)
    ref_f32 = actor_reference_f32(state, params, max_action)
    assert jnp.allclose(out, ref_bf16, atol=5e-3, rtol=5e-3), \
        "mismatch vs bf16-compute JAX reference"
    assert jnp.allclose(out, ref_f32, atol=5e-2, rtol=5e-2), \
        "mismatch vs f32 JAX reference"

    print("KERNEL_OK")
</pallas_src>

<mosaic_0001>
module attributes {stable_mosaic.version = 11 : i64} {
  func.func @_actor_kernel(%arg0: i32, %arg1: memref<16x8xbf16, #tpu.memory_space<vmem>>, %arg2: memref<8x256xbf16, #tpu.memory_space<vmem>>, %arg3: memref<1x256xf32, #tpu.memory_space<vmem>>, %arg4: memref<256x256xbf16, #tpu.memory_space<vmem>>, %arg5: memref<1x256xf32, #tpu.memory_space<vmem>>, %arg6: memref<256x4xbf16, #tpu.memory_space<vmem>>, %arg7: memref<1x4xf32, #tpu.memory_space<vmem>>, %arg8: memref<16x4xf32, #tpu.memory_space<vmem>>, %arg9: memref<16x256xbf16, #tpu.memory_space<vmem>>, %arg10: memref<16x256xbf16, #tpu.memory_space<vmem>>) attributes {dimension_semantics = [#tpu.dimension_semantics<parallel>], iteration_bounds = array<i64: 1>, scalar_prefetch = 0 : i64, scratch_operands = 2 : i64, tpu.core_type = #tpu.core_type<tc>, window_params = [{transform_indices = @transform_0, window_bounds = array<i64: 16, 8>}, {pipeline_mode = #tpu.pipeline_mode<synchronous>, transform_indices = @transform_1, window_bounds = array<i64: 8, 256>}, {pipeline_mode = #tpu.pipeline_mode<synchronous>, transform_indices = @transform_2, window_bounds = array<i64: 1, 256>}, {pipeline_mode = #tpu.pipeline_mode<synchronous>, transform_indices = @transform_3, window_bounds = array<i64: 256, 256>}, {pipeline_mode = #tpu.pipeline_mode<synchronous>, transform_indices = @transform_4, window_bounds = array<i64: 1, 256>}, {pipeline_mode = #tpu.pipeline_mode<synchronous>, transform_indices = @transform_5, window_bounds = array<i64: 256, 4>}, {pipeline_mode = #tpu.pipeline_mode<synchronous>, transform_indices = @transform_6, window_bounds = array<i64: 1, 4>}, {transform_indices = @transform_7, window_bounds = array<i64: 16, 4>}]} {
    %c0 = arith.constant 0 : index
    %c0_0 = arith.constant 0 : index
    %0 = vector.load %arg1[%c0, %c0_0] : memref<16x8xbf16, #tpu.memory_space<vmem>>, vector<16x8xbf16>
    %c0_1 = arith.constant 0 : index
    %c0_2 = arith.constant 0 : index
    %1 = vector.load %arg2[%c0_1, %c0_2] : memref<8x256xbf16, #tpu.memory_space<vmem>>, vector<8x256xbf16>
    %cst = arith.constant dense<0.000000e+00> : vector<16x256xf32>
    %2 = tpu.matmul %0, %1, %cst {dimension_numbers = #tpu.dot_dimension_numbers<[1], [0], [0], [1], [0, 0, 1, 1], [], []>} : vector<16x8xbf16>, vector<8x256xbf16>, vector<16x256xf32> -> vector<16x256xf32>
    %c0_3 = arith.constant 0 : index
    %c0_4 = arith.constant 0 : index
    %3 = vector.load %arg3[%c0_3, %c0_4] : memref<1x256xf32, #tpu.memory_space<vmem>>, vector<1x256xf32>
    %4 = vector.broadcast %3 : vector<1x256xf32> to vector<16x256xf32>
    %5 = arith.addf %2, %4 : vector<16x256xf32>
    %cst_5 = arith.constant 0.000000e+00 : f32
    %6 = vector.broadcast %cst_5 : f32 to vector<16x256xf32>
    %7 = arith.maximumf %5, %6 : vector<16x256xf32>
    %8 = arith.truncf %7 : vector<16x256xf32> to vector<16x256xbf16>
    %c0_6 = arith.constant 0 : index
    %c0_7 = arith.constant 0 : index
    %9 = vector.load %arg9[%c0_6, %c0_7] : memref<16x256xbf16, #tpu.memory_space<vmem>>, vector<16x256xbf16>
    tpu.vector_store %arg9[%c0_6, %c0_7], %8 {strides = array<i32>} : memref<16x256xbf16, #tpu.memory_space<vmem>>, vector<16x256xbf16>,
    %c0_8 = arith.constant 0 : index
    %c0_9 = arith.constant 0 : index
    %10 = vector.load %arg9[%c0_8, %c0_9] : memref<16x256xbf16, #tpu.memory_space<vmem>>, vector<16x256xbf16>
    %c0_10 = arith.constant 0 : index
    %c0_11 = arith.constant 0 : index
    %11 = vector.load %arg4[%c0_10, %c0_11] : memref<256x256xbf16, #tpu.memory_space<vmem>>, vector<256x256xbf16>
    %cst_12 = arith.constant dense<0.000000e+00> : vector<16x256xf32>
    %12 = tpu.matmul %10, %11, %cst_12 {dimension_numbers = #tpu.dot_dimension_numbers<[1], [0], [0], [1], [0, 0, 1, 1], [], []>} : vector<16x256xbf16>, vector<256x256xbf16>, vector<16x256xf32> -> vector<16x256xf32>
    %c0_13 = arith.constant 0 : index
    %c0_14 = arith.constant 0 : index
    %13 = vector.load %arg5[%c0_13, %c0_14] : memref<1x256xf32, #tpu.memory_space<vmem>>, vector<1x256xf32>
    %14 = vector.broadcast %13 : vector<1x256xf32> to vector<16x256xf32>
    %15 = arith.addf %12, %14 : vector<16x256xf32>
    %cst_15 = arith.constant 0.000000e+00 : f32
    %16 = vector.broadcast %cst_15 : f32 to vector<16x256xf32>
    %17 = arith.maximumf %15, %16 : vector<16x256xf32>
    %18 = arith.truncf %17 : vector<16x256xf32> to vector<16x256xbf16>
    %c0_16 = arith.constant 0 : index
    %c0_17 = arith.constant 0 : index
    %19 = vector.load %arg10[%c0_16, %c0_17] : memref<16x256xbf16, #tpu.memory_space<vmem>>, vector<16x256xbf16>
    tpu.vector_store %arg10[%c0_16, %c0_17], %18 {strides = array<i32>} : memref<16x256xbf16, #tpu.memory_space<vmem>>, vector<16x256xbf16>,
    %c0_18 = arith.constant 0 : index
    %c0_19 = arith.constant 0 : index
    %20 = vector.load %arg10[%c0_18, %c0_19] : memref<16x256xbf16, #tpu.memory_space<vmem>>, vector<16x256xbf16>
    %c0_20 = arith.constant 0 : index
    %c0_21 = arith.constant 0 : index
    %21 = vector.load %arg6[%c0_20, %c0_21] : memref<256x4xbf16, #tpu.memory_space<vmem>>, vector<256x4xbf16>
    %cst_22 = arith.constant dense<0.000000e+00> : vector<16x4xf32>
    %22 = tpu.matmul %20, %21, %cst_22 {dimension_numbers = #tpu.dot_dimension_numbers<[1], [0], [0], [1], [0, 0, 1, 1], [], []>} : vector<16x256xbf16>, vector<256x4xbf16>, vector<16x4xf32> -> vector<16x4xf32>
    %c0_23 = arith.constant 0 : index
    %c0_24 = arith.constant 0 : index
    %23 = vector.load %arg7[%c0_23, %c0_24] : memref<1x4xf32, #tpu.memory_space<vmem>>, vector<1x4xf32>
    %24 = vector.broadcast %23 : vector<1x4xf32> to vector<16x4xf32>
    %25 = arith.addf %22, %24 : vector<16x4xf32>
    %26 = math.tanh %25 : vector<16x4xf32>
    %cst_25 = arith.constant 2.000000e+00 : f32
    %27 = vector.broadcast %cst_25 : f32 to vector<16x4xf32>
    %28 = arith.mulf %26, %27 : vector<16x4xf32>
    %c0_26 = arith.constant 0 : index
    %c0_27 = arith.constant 0 : index
    %29 = vector.load %arg8[%c0_26, %c0_27] : memref<16x4xf32, #tpu.memory_space<vmem>>, vector<16x4xf32>
    tpu.vector_store %arg8[%c0_26, %c0_27], %28 {strides = array<i32>} : memref<16x4xf32, #tpu.memory_space<vmem>>, vector<16x4xf32>,
    return
  }
  func.func @transform_0(%arg0: i32) -> (i32, i32) {
    %c0_i32 = arith.constant 0 : i32
    %c0_i32_0 = arith.constant 0 : i32
    return %arg0, %c0_i32 : i32, i32
  }
  func.func @transform_1(%arg0: i32) -> (i32, i32) {
    %c0_i32 = arith.constant 0 : i32
    %c0_i32_0 = arith.constant 0 : i32
    %c0_i32_1 = arith.constant 0 : i32
    return %c0_i32, %c0_i32_0 : i32, i32
  }
  func.func @transform_2(%arg0: i32) -> (i32, i32) {
    %c0_i32 = arith.constant 0 : i32
    %c0_i32_0 = arith.constant 0 : i32
    %c0_i32_1 = arith.constant 0 : i32
    return %c0_i32, %c0_i32_0 : i32, i32
  }
  func.func @transform_3(%arg0: i32) -> (i32, i32) {
    %c0_i32 = arith.constant 0 : i32
    %c0_i32_0 = arith.constant 0 : i32
    %c0_i32_1 = arith.constant 0 : i32
    return %c0_i32, %c0_i32_0 : i32, i32
  }
  func.func @transform_4(%arg0: i32) -> (i32, i32) {
    %c0_i32 = arith.constant 0 : i32
    %c0_i32_0 = arith.constant 0 : i32
    %c0_i32_1 = arith.constant 0 : i32
    return %c0_i32, %c0_i32_0 : i32, i32
  }
  func.func @transform_5(%arg0: i32) -> (i32, i32) {
    %c0_i32 = arith.constant 0 : i32
    %c0_i32_0 = arith.constant 0 : i32
    %c0_i32_1 = arith.constant 0 : i32
    return %c0_i32, %c0_i32_0 : i32, i32
  }
  func.func @transform_6(%arg0: i32) -> (i32, i32) {
    %c0_i32 = arith.constant 0 : i32
    %c0_i32_0 = arith.constant 0 : i32
    %c0_i32_1 = arith.constant 0 : i32
    return %c0_i32, %c0_i32_0 : i32, i32
  }
  func.func @transform_7(%arg0: i32) -> (i32, i32) {
    %c0_i32 = arith.constant 0 : i32
    %c0_i32_0 = arith.constant 0 : i32
    return %arg0, %c0_i32 : i32, i32
  }
}

</mosaic_0001>

<llo_original>
// kernel: tpu_custom_call.1
$region0: #{tpu_custom_call.1}
  #allocation0 [shape = 'u32[]', space=smem, size = 0x4, offset = 0x4, fixed_abs, tag = 'smem constant byte address 0x4 - core index']
  #allocation1 [shape = 'u32[72,128]{1,0:T(1,128)}', space=vmem, size = 0x9000, scoped, tag = 'internal scratch']
  #allocation2 [shape = 'bf16[16,256]{1,0:T(8,128)(2,1)}', space=vmem, size = 0x2000, scoped, tag = 'scratch operand']
  #allocation3 [shape = 'bf16[16,256]{1,0:T(8,128)(2,1)}', space=vmem, size = 0x2000, scoped, tag = 'scratch operand']
  %s0 = inlined_call_operand.vmem [shape: bf16[16,8], index: 0, kind: input, shape index: {}]
  %s1 = inlined_call_operand.vmem [shape: bf16[8,256], index: 1, kind: input, shape index: {}]
  %s2 = inlined_call_operand.vmem [shape: f32[1,256], index: 2, kind: input, shape index: {}]
  %s3 = inlined_call_operand.hbm [shape: bf16[256,256], index: 3, kind: input, shape index: {}]
  %s4 = inlined_call_operand.vmem [shape: f32[1,256], index: 4, kind: input, shape index: {}]
  %s5 = inlined_call_operand.vmem [shape: bf16[256,4], index: 5, kind: input, shape index: {}]
  %s6 = inlined_call_operand.vmem [shape: f32[1,4], index: 6, kind: input, shape index: {}]
  %s7 = inlined_call_operand.vmem [shape: f32[16,4], index: 7, kind: output, shape index: {}]
  %s8 = sld [smem:[#allocation0]]
  $region42: #{tpu_custom_call.1} parent=0
    _
  %s10 = ssub.s32 1, %s8
  %s11 = scalar_select 0, %s10, %s8
  $region1: #{tpu_custom_call.1} parent=0
    #allocation4 [shape = 'u8[131072]{0}', space=vmem, size = 0x20000, scoped, tag = 'input window, operand 3, single buffered']
    #allocation5 [shape = 's32[1]{0}', space=sflag, size = 0x4, scoped, tag = 'scoped memory for tpu_custom_call.1']
    %12 = vsyncpa [#allocation5], 0
    // Predicated region
    $region2: #{tpu_custom_call.1} parent=1 // pred_check
      _
    $region3: #{tpu_custom_call.1} parent=1 // pred_check_branch
      %14 = sbr.rel (0) target = $region5
    $region4: #{tpu_custom_call.1} parent=1 // pred_region
      _
    $region5: #{tpu_custom_call.1} parent=1 // pred_fallthru
      _
    // Predicated region
    $region6: #{tpu_custom_call.1} parent=1 // pred_check
      _
    $region7: #{tpu_custom_call.1} parent=1 // pred_check_branch
      %16 = sbr.rel (0) target = $region9
    $region8: #{tpu_custom_call.1} parent=1 // pred_region
      _
    $region9: #{tpu_custom_call.1} parent=1 // pred_fallthru
      _
    // Predicated region
    $region10: #{tpu_custom_call.1} parent=1 // pred_check
      _
    $region11: #{tpu_custom_call.1} parent=1 // pred_check_branch
      %18 = sbr.rel (0) target = $region13
    $region12: #{tpu_custom_call.1} parent=1 // pred_region
      _
    $region13: #{tpu_custom_call.1} parent=1 // pred_fallthru
      _
    // Predicated region
    $region14: #{tpu_custom_call.1} parent=1 // pred_check
      _
    $region15: #{tpu_custom_call.1} parent=1 // pred_check_branch
      %20 = sbr.rel (0) target = $region17
    $region16: #{tpu_custom_call.1} parent=1 // pred_region
      %22 = vsyncadd [#allocation5], 0
      %s23 = sshll.u32 %s3, 4
      %s24 = int_to_ptr.hbm [resolvable:$true] %s23
      %s25 = sshll.u32 [#allocation4], 4
      %s26 = int_to_ptr.vmem [resolvable:$true] %s25
      %31 = dma.hbm_to_vmem [thread:$0]  %s24, 4096, %s26, [#allocation5], 128, 128, 8
    $region17: #{tpu_custom_call.1} parent=1 // pred_fallthru
      _
    // Predicated region
    $region18: #{tpu_custom_call.1} parent=1 // pred_check
      _
    $region19: #{tpu_custom_call.1} parent=1 // pred_check_branch
      %33 = sbr.rel (0) target = $region21
    $region20: #{tpu_custom_call.1} parent=1 // pred_region
      _
    $region21: #{tpu_custom_call.1} parent=1 // pred_fallthru
      _
    // Predicated region
    $region22: #{tpu_custom_call.1} parent=1 // pred_check
      _
    $region23: #{tpu_custom_call.1} parent=1 // pred_check_branch
      %35 = sbr.rel (0) target = $region25
    $region24: #{tpu_custom_call.1} parent=1 // pred_region
      _
    $region25: #{tpu_custom_call.1} parent=1 // pred_fallthru
      _
    // Predicated region
    $region26: #{tpu_custom_call.1} parent=1 // pred_check
      _
    $region27: #{tpu_custom_call.1} parent=1 // pred_check_branch
      %37 = sbr.rel (0) target = $region29
    $region28: #{tpu_custom_call.1} parent=1 // pred_region
      _
    $region29: #{tpu_custom_call.1} parent=1 // pred_fallthru
      _
    // Predicated region
    $region30: #{tpu_custom_call.1} parent=1 // pred_check
      _
    $region31: #{tpu_custom_call.1} parent=1 // pred_check_branch
      %39 = sbr.rel (0) target = $region33
    $region32: #{tpu_custom_call.1} parent=1 // pred_region
      %41 = dma.done [#allocation5], 4096
    $region33: #{tpu_custom_call.1} parent=1 // pred_fallthru
      _
    %v43 = vld [vmem:[%s0] sm:$0xf]
    %v44 = vld [vmem:[%s0 + $0x4] sm:$0xf]
    %v45 = vld [vmem:[%s1] sm:$0xff]
    %v46 = vld [vmem:[%s2] sm:$0x3]
    %v48 = vperm.slane %v46, 0
    %v49 = vperm.slane %v46, 1
    %v54 = vunpack.c.l.b16 %v43
    %v55 = vunpack.c.l.b16 %v44
    %v56 = vpack.c.b16 %v55, %v54
    %v58 = vunpack.c.l.b16 %v45
    %v59 = vunpack.c.h.b16 %v45
    %v60 = vpack.c.b16 %v58, %v58
    %v61 = vpack.c.b16 %v59, %v59
    %vm62 = vcmask 64512
    %v64 = vsel %vm62, %v56, 0
    %vm66 = vcmask 1043456
    %v68 = vsel %vm66, %v60, 0
    %v71 = vsel %vm66, %v61, 0
    %73 = vmatpush.bf16.msra.mxu0 0
    %74 = vmatpush.bf16.msra.mxu0 0
    %75 = vmatpush.bf16.msra.mxu0 0
    %76 = vmatpush.bf16.msra.mxu0 0
    %77 = vmatpush.bf16.msra.mxu0 0
    %78 = vmatpush.bf16.msra.mxu0 0
    %79 = vmatpush.bf16.msra.mxu0 0
    %80 = vmatpush.bf16.msra.mxu0 %v68
    %81 = vmatmul.bf16.gmra.mxu0 %v64
    %v82 = vpop.f32.mrf.mxu0
    %v83 = vadd.f32 %v48, %v82
    %v84 = vpop.f32.mrf.mxu0
    %v85 = vadd.f32 %v48, %v84
    %86 = vdwg.mxu0
    %87 = vmatpush.bf16.msra.mxu0 0
    %88 = vmatpush.bf16.msra.mxu0 0
    %89 = vmatpush.bf16.msra.mxu0 0
    %90 = vmatpush.bf16.msra.mxu0 0
    %91 = vmatpush.bf16.msra.mxu0 0
    %92 = vmatpush.bf16.msra.mxu0 0
    %93 = vmatpush.bf16.msra.mxu0 0
    %94 = vmatpush.bf16.msra.mxu0 %v71
    %95 = vmatmul.bf16.gmra.mxu0 %v64
    %v96 = vpop.f32.mrf.mxu0
    %v97 = vadd.f32 %v49, %v96
    %v98 = vpop.f32.mrf.mxu0
    %v99 = vadd.f32 %v49, %v98
    %100 = vdwg.mxu0
    %v101 = vmax.f32 %v83, 0.0
    %v102 = vmax.f32 %v97, 0.0
    %v103 = vmax.f32 %v85, 0.0
    %v104 = vmax.f32 %v99, 0.0
    %v105 = vpack.c.bf16 %v102, %v101
    %v106 = vpack.c.bf16 %v104, %v103
    %107 = vst [vmem:[#allocation2] sm:$0xff] %v105
    %108 = vst [vmem:[#allocation2 + $0x8] sm:$0xff] %v106
    %v109 = vld [vmem:[#allocation2] sm:$0xff]
    %v110 = vld [vmem:[#allocation2 + $0x8] sm:$0xff]
    %v111 = vld [vmem:[#allocation4] sm:$0xff]
    %v112 = vld [vmem:[#allocation4 + $0x8] sm:$0xff]
    %v113 = vld [vmem:[#allocation4 + $0x10] sm:$0xff]
    %v114 = vld [vmem:[#allocation4 + $0x18] sm:$0xff]
    %v115 = vld [vmem:[#allocation4 + $0x20] sm:$0xff]
    %v116 = vld [vmem:[#allocation4 + $0x28] sm:$0xff]
    %v117 = vld [vmem:[#allocation4 + $0x30] sm:$0xff]
    %v118 = vld [vmem:[#allocation4 + $0x38] sm:$0xff]
    %v119 = vld [vmem:[#allocation4 + $0x40] sm:$0xff]
    %v120 = vld [vmem:[#allocation4 + $0x48] sm:$0xff]
    %v121 = vld [vmem:[#allocation4 + $0x50] sm:$0xff]
    %v122 = vld [vmem:[#allocation4 + $0x58] sm:$0xff]
    %v123 = vld [vmem:[#allocation4 + $0x60] sm:$0xff]
    %v124 = vld [vmem:[#allocation4 + $0x68] sm:$0xff]
    %v125 = vld [vmem:[#allocation4 + $0x70] sm:$0xff]
    %v126 = vld [vmem:[#allocation4 + $0x78] sm:$0xff]
    %v127 = vld [vmem:[#allocation4 + $0x80] sm:$0xff]
    %v128 = vld [vmem:[#allocation4 + $0x88] sm:$0xff]
    %v129 = vld [vmem:[#allocation4 + $0x90] sm:$0xff]
    %v130 = vld [vmem:[#allocation4 + $0x98] sm:$0xff]
    %v131 = vld [vmem:[#allocation4 + $0xa0] sm:$0xff]
    %v132 = vld [vmem:[#allocation4 + $0xa8] sm:$0xff]
    %v133 = vld [vmem:[#allocation4 + $0xb0] sm:$0xff]
    %v134 = vld [vmem:[#allocation4 + $0xb8] sm:$0xff]
    %v135 = vld [vmem:[#allocation4 + $0xc0] sm:$0xff]
    %v136 = vld [vmem:[#allocation4 + $0xc8] sm:$0xff]
    %v137 = vld [vmem:[#allocation4 + $0xd0] sm:$0xff]
    %v138 = vld [vmem:[#allocation4 + $0xd8] sm:$0xff]
    %v139 = vld [vmem:[#allocation4 + $0xe0] sm:$0xff]
    %v140 = vld [vmem:[#allocation4 + $0xe8] sm:$0xff]
    %v141 = vld [vmem:[#allocation4 + $0xf0] sm:$0xff]
    %v142 = vld [vmem:[#allocation4 + $0xf8] sm:$0xff]
    %v143 = vld [vmem:[%s4] sm:$0x3]
    %v145 = vperm.slane %v143, 0
    %v146 = vperm.slane %v143, 1
    %v151 = vunpack.c.l.b16 %v109
    %v152 = vunpack.c.h.b16 %v109
    %v153 = vunpack.c.l.b16 %v110
    %v154 = vunpack.c.h.b16 %v110
    %v155 = vpack.c.b16 %v153, %v151
    %v156 = vpack.c.b16 %v154, %v152
    %v191 = vunpack.c.l.b16 %v111
    %v192 = vunpack.c.h.b16 %v111
    %v193 = vunpack.c.l.b16 %v112
    %v194 = vunpack.c.h.b16 %v112
    %v195 = vunpack.c.l.b16 %v113
    %v196 = vunpack.c.h.b16 %v113
    %v197 = vunpack.c.l.b16 %v114
    %v198 = vunpack.c.h.b16 %v114
    %v199 = vunpack.c.l.b16 %v115
    %v200 = vunpack.c.h.b16 %v115
    %v201 = vunpack.c.l.b16 %v116
    %v202 = vunpack.c.h.b16 %v116
    %v203 = vunpack.c.l.b16 %v117
    %v204 = vunpack.c.h.b16 %v117
    %v205 = vunpack.c.l.b16 %v118
    %v206 = vunpack.c.h.b16 %v118
    %v207 = vunpack.c.l.b16 %v119
    %v208 = vunpack.c.h.b16 %v119
    %v209 = vunpack.c.l.b16 %v120
    %v210 = vunpack.c.h.b16 %v120
    %v211 = vunpack.c.l.b16 %v121
    %v212 = vunpack.c.h.b16 %v121
    %v213 = vunpack.c.l.b16 %v122
    %v214 = vunpack.c.h.b16 %v122
    %v215 = vunpack.c.l.b16 %v123
    %v216 = vunpack.c.h.b16 %v123
    %v217 = vunpack.c.l.b16 %v124
    %v218 = vunpack.c.h.b16 %v124
    %v219 = vunpack.c.l.b16 %v125
    %v220 = vunpack.c.h.b16 %v125
    %v221 = vunpack.c.l.b16 %v126
    %v222 = vunpack.c.h.b16 %v126
    %v223 = vunpack.c.l.b16 %v127
    %v224 = vunpack.c.h.b16 %v127
    %v225 = vunpack.c.l.b16 %v128
    %v226 = vunpack.c.h.b16 %v128
    %v227 = vunpack.c.l.b16 %v129
    %v228 = vunpack.c.h.b16 %v129
    %v229 = vunpack.c.l.b16 %v130
    %v230 = vunpack.c.h.b16 %v130
    %v231 = vunpack.c.l.b16 %v131
    %v232 = vunpack.c.h.b16 %v131
    %v233 = vunpack.c.l.b16 %v132
    %v234 = vunpack.c.h.b16 %v132
    %v235 = vunpack.c.l.b16 %v133
    %v236 = vunpack.c.h.b16 %v133
    %v237 = vunpack.c.l.b16 %v134
    %v238 = vunpack.c.h.b16 %v134
    %v239 = vunpack.c.l.b16 %v135
    %v240 = vunpack.c.h.b16 %v135
    %v241 = vunpack.c.l.b16 %v136
    %v242 = vunpack.c.h.b16 %v136
    %v243 = vunpack.c.l.b16 %v137
    %v244 = vunpack.c.h.b16 %v137
    %v245 = vunpack.c.l.b16 %v138
    %v246 = vunpack.c.h.b16 %v138
    %v247 = vunpack.c.l.b16 %v139
    %v248 = vunpack.c.h.b16 %v139
    %v249 = vunpack.c.l.b16 %v140
    %v250 = vunpack.c.h.b16 %v140
    %v251 = vunpack.c.l.b16 %v141
    %v252 = vunpack.c.h.b16 %v141
    %v253 = vunpack.c.l.b16 %v142
    %v254 = vunpack.c.h.b16 %v142
    %v255 = vpack.c.b16 %v193, %v191
    %v256 = vpack.c.b16 %v194, %v192
    %v257 = vpack.c.b16 %v197, %v195
    %v258 = vpack.c.b16 %v198, %v196
    %v259 = vpack.c.b16 %v201, %v199
    %v260 = vpack.c.b16 %v202, %v200
    %v261 = vpack.c.b16 %v205, %v203
    %v262 = vpack.c.b16 %v206, %v204
    %v263 = vpack.c.b16 %v209, %v207
    %v264 = vpack.c.b16 %v210, %v208
    %v265 = vpack.c.b16 %v213, %v211
    %v266 = vpack.c.b16 %v214, %v212
    %v267 = vpack.c.b16 %v217, %v215
    %v268 = vpack.c.b16 %v218, %v216
    %v269 = vpack.c.b16 %v221, %v219
    %v270 = vpack.c.b16 %v222, %v220
    %v271 = vpack.c.b16 %v225, %v223
    %v272 = vpack.c.b16 %v226, %v224
    %v273 = vpack.c.b16 %v229, %v227
    %v274 = vpack.c.b16 %v230, %v228
    %v275 = vpack.c.b16 %v233, %v231
    %v276 = vpack.c.b16 %v234, %v232
    %v277 = vpack.c.b16 %v237, %v235
    %v278 = vpack.c.b16 %v238, %v236
    %v279 = vpack.c.b16 %v241, %v239
    %v280 = vpack.c.b16 %v242, %v240
    %v281 = vpack.c.b16 %v245, %v243
    %v282 = vpack.c.b16 %v246, %v244
    %v283 = vpack.c.b16 %v249, %v247
    %v284 = vpack.c.b16 %v250, %v248
    %v285 = vpack.c.b16 %v253, %v251
    %v286 = vpack.c.b16 %v254, %v252
    %319 = vmatpush.bf16.msra.mxu0 %v269
    %320 = vmatpush.bf16.msra.mxu0 %v267
    %321 = vmatpush.bf16.msra.mxu0 %v265
    %322 = vmatpush.bf16.msra.mxu0 %v263
    %323 = vmatpush.bf16.msra.mxu0 %v261
    %324 = vmatpush.bf16.msra.mxu0 %v259
    %325 = vmatpush.bf16.msra.mxu0 %v257
    %326 = vmatpush.bf16.msra.mxu0 %v255
    %327 = vmatmul.bf16.gmra.mxu0 %v155
    %v328 = vpop.f32.mrf.mxu0
    %v329 = vadd.f32 %v145, %v328
    %v330 = vpop.f32.mrf.mxu0
    %v331 = vadd.f32 %v145, %v330
    %332 = vdwg.mxu0
    %333 = vmatpush.bf16.msra.mxu0 %v285
    %334 = vmatpush.bf16.msra.mxu0 %v283
    %335 = vmatpush.bf16.msra.mxu0 %v281
    %336 = vmatpush.bf16.msra.mxu0 %v279
    %337 = vmatpush.bf16.msra.mxu0 %v277
    %338 = vmatpush.bf16.msra.mxu0 %v275
    %339 = vmatpush.bf16.msra.mxu0 %v273
    %340 = vmatpush.bf16.msra.mxu0 %v271
    %341 = vmatmul.bf16.gmra.mxu0 %v156
    %v342 = vpop.f32.mrf.mxu0
    %v343 = vadd.f32 %v329, %v342
    %v344 = vpop.f32.mrf.mxu0
    %v345 = vadd.f32 %v331, %v344
    %346 = vdwg.mxu0
    %347 = vmatpush.bf16.msra.mxu0 %v270
    %348 = vmatpush.bf16.msra.mxu0 %v268
    %349 = vmatpush.bf16.msra.mxu0 %v266
    %350 = vmatpush.bf16.msra.mxu0 %v264
    %351 = vmatpush.bf16.msra.mxu0 %v262
    %352 = vmatpush.bf16.msra.mxu0 %v260
    %353 = vmatpush.bf16.msra.mxu0 %v258
    %354 = vmatpush.bf16.msra.mxu0 %v256
    %355 = vmatmul.bf16.gmra.mxu0 %v155
    %v356 = vpop.f32.mrf.mxu0
    %v357 = vadd.f32 %v146, %v356
    %v358 = vpop.f32.mrf.mxu0
    %v359 = vadd.f32 %v146, %v358
    %360 = vdwg.mxu0
    %361 = vmatpush.bf16.msra.mxu0 %v286
    %362 = vmatpush.bf16.msra.mxu0 %v284
    %363 = vmatpush.bf16.msra.mxu0 %v282
    %364 = vmatpush.bf16.msra.mxu0 %v280
    %365 = vmatpush.bf16.msra.mxu0 %v278
    %366 = vmatpush.bf16.msra.mxu0 %v276
    %367 = vmatpush.bf16.msra.mxu0 %v274
    %368 = vmatpush.bf16.msra.mxu0 %v272
    %369 = vmatmul.bf16.gmra.mxu0 %v156
    %v370 = vpop.f32.mrf.mxu0
    %v371 = vadd.f32 %v357, %v370
    %v372 = vpop.f32.mrf.mxu0
    %v373 = vadd.f32 %v359, %v372
    %374 = vdwg.mxu0
    %v375 = vmax.f32 %v343, 0.0
    %v376 = vmax.f32 %v371, 0.0
    %v377 = vmax.f32 %v345, 0.0
    %v378 = vmax.f32 %v373, 0.0
    %v379 = vpack.c.bf16 %v376, %v375
    %v380 = vpack.c.bf16 %v378, %v377
    %381 = vst [vmem:[#allocation3] sm:$0xff] %v379
    %382 = vst [vmem:[#allocation3 + $0x8] sm:$0xff] %v380
    %v383 = vld [vmem:[#allocation3] sm:$0xff]
    %v384 = vld [vmem:[#allocation3 + $0x8] sm:$0xff]
    %v385 = vld [vmem:[%s5] sm:$0xf]
    %v386 = vld [vmem:[%s5 + $0x4] sm:$0xf]
    %v387 = vld [vmem:[%s5 + $0x8] sm:$0xf]
    %v388 = vld [vmem:[%s5 + $0xc] sm:$0xf]
    %v389 = vld [vmem:[%s5 + $0x10] sm:$0xf]
    %v390 = vld [vmem:[%s5 + $0x14] sm:$0xf]
    %v391 = vld [vmem:[%s5 + $0x18] sm:$0xf]
    %v392 = vld [vmem:[%s5 + $0x1c] sm:$0xf]
    %v393 = vld [vmem:[%s5 + $0x20] sm:$0xf]
    %v394 = vld [vmem:[%s5 + $0x24] sm:$0xf]
    %v395 = vld [vmem:[%s5 + $0x28] sm:$0xf]
    %v396 = vld [vmem:[%s5 + $0x2c] sm:$0xf]
    %v397 = vld [vmem:[%s5 + $0x30] sm:$0xf]
    %v398 = vld [vmem:[%s5 + $0x34] sm:$0xf]
    %v399 = vld [vmem:[%s5 + $0x38] sm:$0xf]
    %v400 = vld [vmem:[%s5 + $0x3c] sm:$0xf]
    %v401 = vld [vmem:[%s5 + $0x40] sm:$0xf]
    %v402 = vld [vmem:[%s5 + $0x44] sm:$0xf]
    %v403 = vld [vmem:[%s5 + $0x48] sm:$0xf]
    %v404 = vld [vmem:[%s5 + $0x4c] sm:$0xf]
    %v405 = vld [vmem:[%s5 + $0x50] sm:$0xf]
    %v406 = vld [vmem:[%s5 + $0x54] sm:$0xf]
    %v407 = vld [vmem:[%s5 + $0x58] sm:$0xf]
    %v408 = vld [vmem:[%s5 + $0x5c] sm:$0xf]
    %v409 = vld [vmem:[%s5 + $0x60] sm:$0xf]
    %v410 = vld [vmem:[%s5 + $0x64] sm:$0xf]
    %v411 = vld [vmem:[%s5 + $0x68] sm:$0xf]
    %v412 = vld [vmem:[%s5 + $0x6c] sm:$0xf]
    %v413 = vld [vmem:[%s5 + $0x70] sm:$0xf]
    %v414 = vld [vmem:[%s5 + $0x74] sm:$0xf]
    %v415 = vld [vmem:[%s5 + $0x78] sm:$0xf]
    %v416 = vld [vmem:[%s5 + $0x7c] sm:$0xf]
    %v417 = vld [vmem:[%s6] sm:$0x1]
    %v419 = vperm.slane %v417, 0
    %v423 = vunpack.c.l.b16 %v383
    %v424 = vunpack.c.h.b16 %v383
    %v425 = vunpack.c.l.b16 %v384
    %v426 = vunpack.c.h.b16 %v384
    %v427 = vpack.c.b16 %v425, %v423
    %v428 = vpack.c.b16 %v426, %v424
    %v463 = vunpack.c.l.b16 %v385
    %v464 = vunpack.c.l.b16 %v386
    %v465 = vunpack.c.l.b16 %v387
    %v466 = vunpack.c.l.b16 %v388
    %v467 = vunpack.c.l.b16 %v389
    %v468 = vunpack.c.l.b16 %v390
    %v469 = vunpack.c.l.b16 %v391
    %v470 = vunpack.c.l.b16 %v392
    %v471 = vunpack.c.l.b16 %v393
    %v472 = vunpack.c.l.b16 %v394
    %v473 = vunpack.c.l.b16 %v395
    %v474 = vunpack.c.l.b16 %v396
    %v475 = vunpack.c.l.b16 %v397
    %v476 = vunpack.c.l.b16 %v398
    %v477 = vunpack.c.l.b16 %v399
    %v478 = vunpack.c.l.b16 %v400
    %v479 = vunpack.c.l.b16 %v401
    %v480 = vunpack.c.l.b16 %v402
    %v481 = vunpack.c.l.b16 %v403
    %v482 = vunpack.c.l.b16 %v404
    %v483 = vunpack.c.l.b16 %v405
    %v484 = vunpack.c.l.b16 %v406
    %v485 = vunpack.c.l.b16 %v407
    %v486 = vunpack.c.l.b16 %v408
    %v487 = vunpack.c.l.b16 %v409
    %v488 = vunpack.c.l.b16 %v410
    %v489 = vunpack.c.l.b16 %v411
    %v490 = vunpack.c.l.b16 %v412
    %v491 = vunpack.c.l.b16 %v413
    %v492 = vunpack.c.l.b16 %v414
    %v493 = vunpack.c.l.b16 %v415
    %v494 = vunpack.c.l.b16 %v416
    %v495 = vpack.c.b16 %v464, %v463
    %v496 = vpack.c.b16 %v466, %v465
    %v497 = vpack.c.b16 %v468, %v467
    %v498 = vpack.c.b16 %v470, %v469
    %v499 = vpack.c.b16 %v472, %v471
    %v500 = vpack.c.b16 %v474, %v473
    %v501 = vpack.c.b16 %v476, %v475
    %v502 = vpack.c.b16 %v478, %v477
    %v503 = vpack.c.b16 %v480, %v479
    %v504 = vpack.c.b16 %v482, %v481
    %v505 = vpack.c.b16 %v484, %v483
    %v506 = vpack.c.b16 %v486, %v485
    %v507 = vpack.c.b16 %v488, %v487
    %v508 = vpack.c.b16 %v490, %v489
    %v509 = vpack.c.b16 %v492, %v491
    %v510 = vpack.c.b16 %v494, %v493
    %527 = vmatpush.bf16.msra.mxu0 %v502
    %528 = vmatpush.bf16.msra.mxu0 %v501
    %529 = vmatpush.bf16.msra.mxu0 %v500
    %530 = vmatpush.bf16.msra.mxu0 %v499
    %531 = vmatpush.bf16.msra.mxu0 %v498
    %532 = vmatpush.bf16.msra.mxu0 %v497
    %533 = vmatpush.bf16.msra.mxu0 %v496
    %534 = vmatpush.bf16.msra.mxu0 %v495
    %535 = vmatmul.bf16.gmra.mxu0 %v427
    %v536 = vpop.f32.mrf.mxu0
    %v537 = vadd.f32 %v419, %v536
    %v538 = vpop.f32.mrf.mxu0
    %v539 = vadd.f32 %v419, %v538
    %540 = vdwg.mxu0
    %541 = vmatpush.bf16.msra.mxu0 %v510
    %542 = vmatpush.bf16.msra.mxu0 %v509
    %543 = vmatpush.bf16.msra.mxu0 %v508
    %544 = vmatpush.bf16.msra.mxu0 %v507
    %545 = vmatpush.bf16.msra.mxu0 %v506
    %546 = vmatpush.bf16.msra.mxu0 %v505
    %547 = vmatpush.bf16.msra.mxu0 %v504
    %548 = vmatpush.bf16.msra.mxu0 %v503
    %549 = vmatmul.bf16.gmra.mxu0 %v428
    %v550 = vpop.f32.mrf.mxu0
    %v551 = vadd.f32 %v537, %v550
    %v552 = vpop.f32.mrf.mxu0
    %v553 = vadd.f32 %v539, %v552
    %554 = vdwg.mxu0
    %v555 = vtanh.pop %v551
    %v556 = vtanh.pop %v553
    %v557 = vmul.f32 %v555, 2.0
    %v558 = vmul.f32 %v556, 2.0
    %vm559 = vcmask 31744
    %560 = vst.msk [vmem:[%s7] sm:$0xff] %vm559, %v557
    %561 = vst.msk [vmem:[%s7 + $0x8] sm:$0xff] %vm559, %v558
    // Predicated region
    $region34: #{tpu_custom_call.1} parent=1 // pred_check
      _
    $region35: #{tpu_custom_call.1} parent=1 // pred_check_branch
      %563 = sbr.rel (0) target = $region37
    $region36: #{tpu_custom_call.1} parent=1 // pred_region
      _
    $region37: #{tpu_custom_call.1} parent=1 // pred_fallthru
      _
    // Predicated region
    $region38: #{tpu_custom_call.1} parent=1 // pred_check
      _
    $region39: #{tpu_custom_call.1} parent=1 // pred_check_branch
      %565 = sbr.rel (0) target = $region41
    $region40: #{tpu_custom_call.1} parent=1 // pred_region
      _
    $region41: #{tpu_custom_call.1} parent=1 // pred_fallthru
      _
    %566 = vsyncpa [#allocation5], 1

</llo_original>
